<compile_context>
chip_gen: v6e
topology: v6e:2x2x1
jax: 0.10.0
libtpu: 0.0.40
codegen_flags: <defaults>
</compile_context>

<pallas_src>
import functools

import jax
import jax.numpy as jnp
from jax.experimental import pallas as pl
from jax.experimental.pallas import tpu as pltpu


# ----------------------------------------------------------------------------- GELU

_SQRT_2_OVER_PI = 0.7978845608028654


def _gelu_tanh(x):
    # tanh-approximate GELU: one EUP op + a few VALU ops per element.
    # NOTE: ~1e-3 max abs deviation from torch.nn.GELU()'s exact erf formulation.
    return 0.5 * x * (1.0 + jnp.tanh(_SQRT_2_OVER_PI * (x + 0.044715 * x * x * x)))


def _erf(x):
    # Abramowitz & Stegun 7.1.26 rational approximation (max abs err ~1.5e-7),
    # built from ops that lower cleanly on the TPU VPU/EUP (mul/add/exp/where).
    a1 = 0.254829592
    a2 = -0.284496736
    a3 = 1.421413741
    a4 = -1.453152027
    a5 = 1.061405429
    p = 0.3275911
    ax = jnp.abs(x)
    t = 1.0 / (1.0 + p * ax)
    poly = ((((a5 * t + a4) * t + a3) * t + a2) * t + a1) * t
    y = 1.0 - poly * jnp.exp(-ax * ax)
    return jnp.where(x >= 0, y, -y)


def _gelu_erf(x):
    # Matches torch.nn.GELU() (erf formulation) to ~1e-7.
    return 0.5 * x * (1.0 + _erf(x * 0.7071067811865476))


# ----------------------------------------------------------------------------- kernels

def acm_kernel_tri(x_ref, w1_ref, w2_ref, o_ref, *, gelu_fn):
    """Triangular-W2 variant: cumsum folded into one wide full-depth matmul.

    x_ref : (tn, H)               row tile of tokens
    w1_ref: (H, nb*D)             full W1, VMEM-resident (constant index_map)
    w2_ref: (nb*D, (nb+1)*H)      block-lower-triangular W2 (col-block 0 = zeros)
    o_ref : (tn, (nb+1)*H)        all choices for this tile, choice-major in lanes
    """
    h = jnp.dot(x_ref[...], w1_ref[...], preferred_element_type=jnp.float32)
    # Single cast of the full hidden tensor (halves its live/spill footprint).
    h = gelu_fn(h).astype(w2_ref.dtype)
    out = jnp.dot(h, w2_ref[...], preferred_element_type=jnp.float32)
    # One lane-dense full-tile store; the zero choice comes out of the matmul.
    o_ref[...] = out.astype(o_ref.dtype)


def acm_kernel_blocked(x_ref, w1_ref, w2_ref, o_ref, *, num_blocks, block_dim,
                       hidden_dim, gelu_fn):
    """Per-block fallback (used when the triangular W2 would not fit VMEM).

    x_ref : (tn, H); w1_ref: (H, nb*D); w2_ref: (nb, D, H); o_ref: (tn, (nb+1)*H)
    """
    tn = x_ref.shape[0]
    h = jnp.dot(x_ref[...], w1_ref[...], preferred_element_type=jnp.float32)
    h = gelu_fn(h).astype(w2_ref.dtype)

    # Choice 0 is the zero result (kept for layout fidelity with forward_all;
    # it is pure HBM-write overhead, ~1/(nb+1) of the output bytes).
    o_ref[:, 0:hidden_dim] = jnp.zeros((tn, hidden_dim), o_ref.dtype)

    acc0 = jnp.zeros((tn, hidden_dim), jnp.float32)
    if num_blocks <= 8:
        acc = acc0
        for b in range(num_blocks):  # small static unroll
            hb = h[:, b * block_dim:(b + 1) * block_dim]
            acc = acc + jnp.dot(hb, w2_ref[b], preferred_element_type=jnp.float32)
            o_ref[:, (b + 1) * hidden_dim:(b + 2) * hidden_dim] = acc.astype(o_ref.dtype)
    else:
        # Large num_blocks: bounded live ranges via fori_loop (modest unroll).
        def body(b, acc):
            hb = jax.lax.dynamic_slice(h, (0, b * block_dim), (tn, block_dim))
            acc = acc + jnp.dot(hb, w2_ref[b], preferred_element_type=jnp.float32)
            off = pl.multiple_of((b + 1) * hidden_dim, hidden_dim)
            o_ref[:, pl.ds(off, hidden_dim)] = acc.astype(o_ref.dtype)
            return acc
        jax.lax.fori_loop(0, num_blocks, body, acc0, unroll=2)


# ----------------------------------------------------------------------------- planning

def _vmem_limit_bytes():
    """Per-generation scoped-VMEM limit.

    ~80% of physical on 128 MiB parts (v5e/v6e, capped at 112 MiB), ~75% on
    v7x's 64 MiB per-TC VMEM.
    """
    try:
        phys = int(pltpu.get_tpu_info().vmem_capacity_bytes)
    except Exception:
        phys = 64 * 1024 * 1024  # conservative (v7x per-TC VMEM)
    if phys <= 64 * 1024 * 1024:
        return int(phys * 0.75)
    return min(int(phys * 0.80), 112 * 1024 * 1024)


def _select_row_tile(N, H, nb, D, nc, cb, ob, budget, max_tn=1024):
    """Largest row tile (multiple of 8) whose working set fits `budget`,
    evened out so the grid has >= 2 steps (v7x megacore) and padding stays small."""
    def tile_bytes(t):
        return (2 * t * H * cb            # double-buffered x tile
                + 2 * t * nc * H * ob     # double-buffered output tile
                + t * nb * D * (4 + cb)   # f32 hidden + compute-dtype copy
                + t * nc * H * 4)         # f32 second-stage result before cast

    fit = 8
    for t in range(16, max_tn + 1, 8):
        if tile_bytes(t) > budget:
            break
        fit = t

    min_steps = 2 if N > 8 else 1         # give both v7x TensorCores work
    steps = max(min_steps, -(-N // fit))
    rows = -(-N // steps)                 # ceil(N / steps): even tiles, small padding
    tn = -(-rows // 8) * 8                # round up to sublane multiple
    return max(8, min(fit, tn))


def _const_spec(shape, mode):
    """Full-block BlockSpec with a constant index_map (VMEM-resident weight)."""
    index_map = lambda i: (0,) * len(shape)
    if mode is None:
        return pl.BlockSpec(shape, index_map)
    return pl.BlockSpec(shape, index_map, pipeline_mode=mode)


# ----------------------------------------------------------------------------- wrapper

def acm_forward_all(x, w1, w2, *, block_dim, num_blocks, tn=None,
                    compute_dtype=jnp.bfloat16, out_dtype=None,
                    gelu_approximate=True, use_triangular=None):
    """x: (B, S, H).  Returns (B, S, num_choices, H) matching forward_all + view.

    compute_dtype : MXU input dtype (f32 accumulation always kept).  Default bf16
                    (2-4x MXU rate, half the weight/x DMA and VMEM bytes).
                    Pass None to compute in x.dtype.
    out_dtype     : output / HBM-write dtype.  Defaults to x.dtype; pass bf16 to
                    halve the dominant write stream when the consumer tolerates it.
    gelu_approximate : tanh GELU (default; ~1e-3 abs shift vs torch's erf GELU)
                    vs the erf-accurate path.
    use_triangular: fold the block cumsum into one wide full-depth matmul against a
                    block-lower-triangular W2 (fixes MXU K-starvation when
                    block_dim < 128).  None = auto by VMEM footprint.
    """
    B, S, H = x.shape
    N = B * S
    nb, D, nc = num_blocks, block_dim, num_blocks + 1

    out_dt = jnp.dtype(x.dtype) if out_dtype is None else jnp.dtype(out_dtype)
    cdt = jnp.dtype(x.dtype) if compute_dtype is None else jnp.dtype(compute_dtype)
    cb = cdt.itemsize
    ob = out_dt.itemsize

    vmem_limit = _vmem_limit_bytes()
    gelu_fn = _gelu_tanh if gelu_approximate else _gelu_erf

    # ---- choose kernel variant & build weights ----
    w1_bytes = H * nb * D * cb
    if use_triangular is None:
        w2_tri_bytes = nb * D * nc * H * cb
        frac = 2 if D < 128 else 3   # K-starved second matmul -> prefer triangular
        use_triangular = (w1_bytes + w2_tri_bytes) <= vmem_limit // frac

    if use_triangular:
        w2_blocks = w2.reshape(nb, D, H)
        # Column-block c holds W2_b for b < c (c = 0 is the all-zero choice).
        mask = jnp.arange(nb)[:, None] < jnp.arange(nc)[None, :]          # (nb, nc)
        w2_k = jnp.where(mask[:, None, :, None], w2_blocks[:, :, None, :], 0.0)
        w2_k = w2_k.reshape(nb * D, nc * H)
        w_bytes = w1_bytes + nb * D * nc * H * cb
        flops = 2 * N * H * nb * D + 2 * N * nb * D * nc * H
        kernel = functools.partial(acm_kernel_tri, gelu_fn=gelu_fn)
    else:
        w2_k = w2.reshape(nb, D, H)
        w_bytes = w1_bytes + nb * D * H * cb
        flops = 2 * N * H * nb * D + 2 * N * nb * D * H
        kernel = functools.partial(acm_kernel_blocked, num_blocks=nb, block_dim=D,
                                   hidden_dim=H, gelu_fn=gelu_fn)
    w1_k = w1.astype(cdt)
    w2_k = w2_k.astype(cdt)

    # ---- row tile + padding (no divisor requirement on N) ----
    budget = vmem_limit - w_bytes - 2 * 1024 * 1024   # headroom for compiler scratch
    if tn is None:
        tn = _select_row_tile(N, H, nb, D, nc, cb, ob, budget)
    tn = max(8, (int(tn) // 8) * 8)
    N_pad = tn * pl.cdiv(N, tn)
    grid = (N_pad // tn,)

    x2 = x.reshape(N, H).astype(cdt)
    if N_pad != N:
        x2 = jnp.pad(x2, ((0, N_pad - N), (0, 0)))

    cost = pl.CostEstimate(
        flops=flops,
        transcendentals=N_pad * nb * D,   # one tanh/exp per hidden element
        bytes_accessed=N_pad * H * cb + w_bytes + N_pad * nc * H * ob)

    def run(weight_mode):
        in_specs = [
            pl.BlockSpec((tn, H), lambda i: (i, 0)),
            _const_spec(w1_k.shape, weight_mode),
            _const_spec(w2_k.shape, weight_mode),
        ]
        return pl.pallas_call(
            kernel,
            out_shape=jax.ShapeDtypeStruct((N_pad, nc * H), out_dt),
            grid_spec=pltpu.PrefetchScalarGridSpec(
                num_scalar_prefetch=0,
                grid=grid,
                in_specs=in_specs,
                out_specs=pl.BlockSpec((tn, nc * H), lambda i: (i, 0)),
            ),
            compiler_params=pltpu.CompilerParams(
                dimension_semantics=("parallel",),
                vmem_limit_bytes=vmem_limit),
            cost_estimate=cost,
        )(x2, w1_k, w2_k)

    try:
        # Resident weights have constant index_maps -> single-buffer them to halve
        # their VMEM footprint (frees room for a larger row tile).
        out = run(pl.Buffered(1))
    except Exception:
        # Fallback for Pallas builds that reject pipeline_mode on the top-level
        # grid: default double-buffering (costs 2x weight VMEM, numerics identical).
        out = run(None)

    if N_pad != N:
        out = out[:N]
    # (N, nc*H) -> (B, S, nc, H): pure metadata reshape, no transpose / extra HBM pass.
    return out.reshape(B, S, nc, H)


# ----------------------------------------------------------------------------- reference

def acm_reference(x, w1, w2, *, block_dim, num_blocks):
    """Pure-JAX reference mirroring forward_all (eval mode, bias=False, erf GELU)."""
    B, S, H = x.shape
    N = B * S
    xf = x.reshape(N, H)
    zero = jnp.zeros((N, 1, H), x.dtype)
    h = jnp.dot(xf, w1, precision=jax.lax.Precision.HIGHEST)
    h = jax.nn.gelu(h, approximate=False)
    hc = h.reshape(N, num_blocks, block_dim)
    w2c = w2.reshape(num_blocks, block_dim, H)
    chunks = jnp.einsum("nbd,bdh->nbh", hc, w2c,
                        precision=jax.lax.Precision.HIGHEST)
    full = jnp.concatenate([zero, chunks], axis=1)
    full = jnp.cumsum(full, axis=1)  # detach terms cancel in the forward pass
    return full.reshape(B, S, num_blocks + 1, H)


# ----------------------------------------------------------------------------- demo

if __name__ == "__main__":
    # Small deterministic problem.
    B, S = 2, 8
    hidden_dim = 32
    block_dim = 16
    num_blocks = 3
    nc = num_blocks + 1

    key = jax.random.PRNGKey(0)
    kx, k1, k2 = jax.random.split(key, 3)

    # kaiming_uniform_(a=sqrt(5)) => U(-1/sqrt(fan_in), 1/sqrt(fan_in)), fan_in = dim 1
    b1 = 1.0 / (num_blocks * block_dim) ** 0.5
    b2 = 1.0 / hidden_dim ** 0.5
    w1 = jax.random.uniform(k1, (hidden_dim, num_blocks * block_dim),
                            jnp.float32, -b1, b1)
    w2 = jax.random.uniform(k2, (num_blocks * block_dim, hidden_dim),
                            jnp.float32, -b2, b2)
    x = jax.random.normal(kx, (B, S, hidden_dim), jnp.float32)

    ref = acm_reference(x, w1, w2, block_dim=block_dim, num_blocks=num_blocks)

    # 1) Default optimized path: bf16 compute, tanh GELU, triangular W2.
    out = acm_forward_all(x, w1, w2, block_dim=block_dim, num_blocks=num_blocks)
    out = jax.block_until_ready(out)
    assert out.shape == (B, S, nc, hidden_dim)
    assert jnp.allclose(out, ref, atol=2e-2, rtol=2e-2), "bf16/tanh path mismatch"

    # 2) Accuracy path: f32 compute, erf GELU, triangular W2.
    out_f32 = acm_forward_all(x, w1, w2, block_dim=block_dim, num_blocks=num_blocks,
                              compute_dtype=None, gelu_approximate=False)
    out_f32 = jax.block_until_ready(out_f32)
    assert jnp.allclose(out_f32, ref, atol=1e-2, rtol=1e-2), "f32/erf path mismatch"

    # 3) Per-block fallback kernel (used automatically when the triangular W2
    #    would not fit VMEM); exercised explicitly here at small shapes.
    out_blk = acm_forward_all(x, w1, w2, block_dim=block_dim, num_blocks=num_blocks,
                              compute_dtype=None, gelu_approximate=False,
                              use_triangular=False)
    out_blk = jax.block_until_ready(out_blk)
    assert out_blk.shape == (B, S, nc, hidden_dim)
    assert jnp.allclose(out_blk, ref, atol=1e-2, rtol=1e-2), "blocked path mismatch"

    print("KERNEL_OK")
</pallas_src>

<mosaic_0001>
module attributes {stable_mosaic.version = 11 : i64} {
  func.func @acm_kernel_tri(%arg0: i32, %arg1: memref<8x32xbf16, #tpu.memory_space<vmem>>, %arg2: memref<32x48xbf16, #tpu.memory_space<vmem>>, %arg3: memref<48x128xbf16, #tpu.memory_space<vmem>>, %arg4: memref<8x128xf32, #tpu.memory_space<vmem>>) attributes {dimension_semantics = [#tpu.dimension_semantics<parallel>], iteration_bounds = array<i64: 2>, scalar_prefetch = 0 : i64, scratch_operands = 0 : i64, tpu.core_type = #tpu.core_type<tc>, window_params = [{transform_indices = @transform_0, window_bounds = array<i64: 8, 32>}, {pipeline_mode = #tpu.pipeline_mode<synchronous>, transform_indices = @transform_1, window_bounds = array<i64: 32, 48>}, {pipeline_mode = #tpu.pipeline_mode<synchronous>, transform_indices = @transform_2, window_bounds = array<i64: 48, 128>}, {transform_indices = @transform_3, window_bounds = array<i64: 8, 128>}]} {
    %c0 = arith.constant 0 : index
    %c0_0 = arith.constant 0 : index
    %0 = vector.load %arg1[%c0, %c0_0] : memref<8x32xbf16, #tpu.memory_space<vmem>>, vector<8x32xbf16>
    %c0_1 = arith.constant 0 : index
    %c0_2 = arith.constant 0 : index
    %1 = vector.load %arg2[%c0_1, %c0_2] : memref<32x48xbf16, #tpu.memory_space<vmem>>, vector<32x48xbf16>
    %cst = arith.constant dense<0.000000e+00> : vector<8x48xf32>
    %2 = tpu.matmul %0, %1, %cst {dimension_numbers = #tpu.dot_dimension_numbers<[1], [0], [0], [1], [0, 0, 1, 1], [], []>} : vector<8x32xbf16>, vector<32x48xbf16>, vector<8x48xf32> -> vector<8x48xf32>
    %cst_3 = arith.constant 5.000000e-01 : f32
    %3 = vector.broadcast %cst_3 : f32 to vector<8x48xf32>
    %4 = arith.mulf %3, %2 : vector<8x48xf32>
    %cst_4 = arith.constant 4.471500e-02 : f32
    %5 = vector.broadcast %cst_4 : f32 to vector<8x48xf32>
    %6 = arith.mulf %5, %2 : vector<8x48xf32>
    %7 = arith.mulf %6, %2 : vector<8x48xf32>
    %8 = arith.mulf %7, %2 : vector<8x48xf32>
    %9 = arith.addf %2, %8 : vector<8x48xf32>
    %cst_5 = arith.constant 0.797884583 : f32
    %10 = vector.broadcast %cst_5 : f32 to vector<8x48xf32>
    %11 = arith.mulf %10, %9 : vector<8x48xf32>
    %12 = math.tanh %11 : vector<8x48xf32>
    %cst_6 = arith.constant 1.000000e+00 : f32
    %13 = vector.broadcast %cst_6 : f32 to vector<8x48xf32>
    %14 = arith.addf %13, %12 : vector<8x48xf32>
    %15 = arith.mulf %4, %14 : vector<8x48xf32>
    %16 = arith.truncf %15 : vector<8x48xf32> to vector<8x48xbf16>
    %c0_7 = arith.constant 0 : index
    %c0_8 = arith.constant 0 : index
    %17 = vector.load %arg3[%c0_7, %c0_8] : memref<48x128xbf16, #tpu.memory_space<vmem>>, vector<48x128xbf16>
    %cst_9 = arith.constant dense<0.000000e+00> : vector<8x128xf32>
    %18 = tpu.matmul %16, %17, %cst_9 {dimension_numbers = #tpu.dot_dimension_numbers<[1], [0], [0], [1], [0, 0, 1, 1], [], []>} : vector<8x48xbf16>, vector<48x128xbf16>, vector<8x128xf32> -> vector<8x128xf32>
    %c0_10 = arith.constant 0 : index
    %c0_11 = arith.constant 0 : index
    %19 = vector.load %arg4[%c0_10, %c0_11] : memref<8x128xf32, #tpu.memory_space<vmem>>, vector<8x128xf32>
    tpu.vector_store %arg4[%c0_10, %c0_11], %18 {strides = array<i32>} : memref<8x128xf32, #tpu.memory_space<vmem>>, vector<8x128xf32>,
    return
  }
  func.func @transform_0(%arg0: i32) -> (i32, i32) {
    %c0_i32 = arith.constant 0 : i32
    %c0_i32_0 = arith.constant 0 : i32
    return %arg0, %c0_i32 : i32, i32
  }
  func.func @transform_1(%arg0: i32) -> (i32, i32) {
    %c0_i32 = arith.constant 0 : i32
    %c0_i32_0 = arith.constant 0 : i32
    %c0_i32_1 = arith.constant 0 : i32
    return %c0_i32, %c0_i32_0 : i32, i32
  }
  func.func @transform_2(%arg0: i32) -> (i32, i32) {
    %c0_i32 = arith.constant 0 : i32
    %c0_i32_0 = arith.constant 0 : i32
    %c0_i32_1 = arith.constant 0 : i32
    return %c0_i32, %c0_i32_0 : i32, i32
  }
  func.func @transform_3(%arg0: i32) -> (i32, i32) {
    %c0_i32 = arith.constant 0 : i32
    %c0_i32_0 = arith.constant 0 : i32
    return %arg0, %c0_i32 : i32, i32
  }
}

module attributes {stable_mosaic.version = 11 : i64} {
  func.func @acm_kernel_tri(%arg0: i32, %arg1: memref<8x32xbf16, #tpu.memory_space<vmem>>, %arg2: memref<32x48xbf16, #tpu.memory_space<vmem>>, %arg3: memref<48x128xbf16, #tpu.memory_space<vmem>>, %arg4: memref<8x128xf32, #tpu.memory_space<vmem>>) attributes {dimension_semantics = [#tpu.dimension_semantics<parallel>], iteration_bounds = array<i64: 2>, scalar_prefetch = 0 : i64, scratch_operands = 0 : i64, tpu.core_type = #tpu.core_type<tc>, window_params = [{transform_indices = @transform_0, window_bounds = array<i64: 8, 32>}, {pipeline_mode = #tpu.pipeline_mode<synchronous>, transform_indices = @transform_1, window_bounds = array<i64: 32, 48>}, {pipeline_mode = #tpu.pipeline_mode<synchronous>, transform_indices = @transform_2, window_bounds = array<i64: 48, 128>}, {transform_indices = @transform_3, window_bounds = array<i64: 8, 128>}]} {
    %c0 = arith.constant 0 : index
    %c0_0 = arith.constant 0 : index
    %0 = vector.load %arg1[%c0, %c0_0] : memref<8x32xbf16, #tpu.memory_space<vmem>>, vector<8x32xbf16>
    %c0_1 = arith.constant 0 : index
    %c0_2 = arith.constant 0 : index
    %1 = vector.load %arg2[%c0_1, %c0_2] : memref<32x48xbf16, #tpu.memory_space<vmem>>, vector<32x48xbf16>
    %cst = arith.constant dense<0.000000e+00> : vector<8x48xf32>
    %2 = tpu.matmul %0, %1, %cst {dimension_numbers = #tpu.dot_dimension_numbers<[1], [0], [0], [1], [0, 0, 1, 1], [], []>} : vector<8x32xbf16>, vector<32x48xbf16>, vector<8x48xf32> -> vector<8x48xf32>
    %cst_3 = arith.constant 5.000000e-01 : f32
    %3 = vector.broadcast %cst_3 : f32 to vector<8x48xf32>
    %4 = arith.mulf %3, %2 : vector<8x48xf32>
    %cst_4 = arith.constant 4.471500e-02 : f32
    %5 = vector.broadcast %cst_4 : f32 to vector<8x48xf32>
    %6 = arith.mulf %5, %2 : vector<8x48xf32>
    %7 = arith.mulf %6, %2 : vector<8x48xf32>
    %8 = arith.mulf %7, %2 : vector<8x48xf32>
    %9 = arith.addf %2, %8 : vector<8x48xf32>
    %cst_5 = arith.constant 0.797884583 : f32
    %10 = vector.broadcast %cst_5 : f32 to vector<8x48xf32>
    %11 = arith.mulf %10, %9 : vector<8x48xf32>
    %12 = math.tanh %11 : vector<8x48xf32>
    %cst_6 = arith.constant 1.000000e+00 : f32
    %13 = vector.broadcast %cst_6 : f32 to vector<8x48xf32>
    %14 = arith.addf %13, %12 : vector<8x48xf32>
    %15 = arith.mulf %4, %14 : vector<8x48xf32>
    %16 = arith.truncf %15 : vector<8x48xf32> to vector<8x48xbf16>
    %c0_7 = arith.constant 0 : index
    %c0_8 = arith.constant 0 : index
    %17 = vector.load %arg3[%c0_7, %c0_8] : memref<48x128xbf16, #tpu.memory_space<vmem>>, vector<48x128xbf16>
    %cst_9 = arith.constant dense<0.000000e+00> : vector<8x128xf32>
    %18 = tpu.matmul %16, %17, %cst_9 {dimension_numbers = #tpu.dot_dimension_numbers<[1], [0], [0], [1], [0, 0, 1, 1], [], []>} : vector<8x48xbf16>, vector<48x128xbf16>, vector<8x128xf32> -> vector<8x128xf32>
    %c0_10 = arith.constant 0 : index
    %c0_11 = arith.constant 0 : index
    %19 = vector.load %arg4[%c0_10, %c0_11] : memref<8x128xf32, #tpu.memory_space<vmem>>, vector<8x128xf32>
    tpu.vector_store %arg4[%c0_10, %c0_11], %18 {strides = array<i32>} : memref<8x128xf32, #tpu.memory_space<vmem>>, vector<8x128xf32>,
    return
  }
  func.func @transform_0(%arg0: i32) -> (i32, i32) {
    %c0_i32 = arith.constant 0 : i32
    %c0_i32_0 = arith.constant 0 : i32
    return %arg0, %c0_i32 : i32, i32
  }
  func.func @transform_1(%arg0: i32) -> (i32, i32) {
    %c0_i32 = arith.constant 0 : i32
    %c0_i32_0 = arith.constant 0 : i32
    %c0_i32_1 = arith.constant 0 : i32
    return %c0_i32, %c0_i32_0 : i32, i32
  }
  func.func @transform_2(%arg0: i32) -> (i32, i32) {
    %c0_i32 = arith.constant 0 : i32
    %c0_i32_0 = arith.constant 0 : i32
    %c0_i32_1 = arith.constant 0 : i32
    return %c0_i32, %c0_i32_0 : i32, i32
  }
  func.func @transform_3(%arg0: i32) -> (i32, i32) {
    %c0_i32 = arith.constant 0 : i32
    %c0_i32_0 = arith.constant 0 : i32
    return %arg0, %c0_i32 : i32, i32
  }
}

</mosaic_0001>

<llo_original>
// kernel: tpu_custom_call.1
$region0: #{tpu_custom_call.1}
  #allocation0 [shape = 'u32[]', space=smem, size = 0x4, offset = 0x4, fixed_abs, tag = 'smem constant byte address 0x4 - core index']
  #allocation1 [shape = 'u32[144,128]{1,0:T(1,128)}', space=vmem, size = 0x12000, scoped, tag = 'internal scratch']
  %s0 = inlined_call_operand.hbm [shape: bf16[16,32], index: 0, kind: input, shape index: {}]
  %s1 = inlined_call_operand.hbm [shape: bf16[32,48], index: 1, kind: input, shape index: {}]
  %s2 = inlined_call_operand.hbm [shape: bf16[48,128], index: 2, kind: input, shape index: {}]
  %s3 = inlined_call_operand.hbm [shape: f32[16,128], index: 3, kind: output, shape index: {}]
  %s4 = sld [smem:[#allocation0]]
  $region57: #{tpu_custom_call.1} parent=0
    _
  %s6 = ssub.s32 1, %s4
  %s7 = scalar_select 0, %s6, %s4
  $region1: #{tpu_custom_call.1} parent=0
    #allocation2 [shape = 'u8[4096]{0}', space=vmem, size = 0x1000, scoped, tag = 'input window, operand 0']
    #allocation3 [shape = 's32[2]{0}', space=sflag, size = 0x8, scoped, tag = 'scoped memory for tpu_custom_call.1']
    #allocation4 [shape = 's32[2]{0}', space=sflag, size = 0x8, scoped, tag = 'scoped memory for tpu_custom_call.1']
    #allocation5 [shape = 'u8[8192]{0}', space=vmem, size = 0x2000, scoped, tag = 'input window, operand 1, single buffered']
    #allocation6 [shape = 's32[1]{0}', space=sflag, size = 0x4, scoped, tag = 'scoped memory for tpu_custom_call.1']
    #allocation7 [shape = 'u8[12288]{0}', space=vmem, size = 0x3000, scoped, tag = 'input window, operand 2, single buffered']
    #allocation8 [shape = 'u8[8192]{0}', space=vmem, size = 0x2000, scoped, tag = 'output window, operand 0']
    %8 = vsyncpa [#allocation3], 0
    %s9 = scalar_lea.sflag [#allocation3], 1
    %10 = vsyncpa %s9, 0
    %11 = vsyncpa [#allocation6], 0
    %12 = vsyncpa [#allocation4], 0
    %s13 = scalar_lea.sflag [#allocation4], 1
    %14 = vsyncpa %s13, 0
    loop: start=0, step=1, limit=4
    $region2: #{tpu_custom_call.1} parent=1 // loop_pre_header
      _
    $region3: #{tpu_custom_call.1} parent=1 // loop_header
      %s16 = sphi 0, %s20
      %p17 = scmp.ge.s32.totalorder %s16, 4
      %s26 = sphi 0, %s28
      %s29 = sphi 0, %s26
      %s30 = sphi 0, %s29
      %s46 = sphi 0, %s30
      %s50 = sphi 0, %s50
      %s52 = sphi 0, %s50
      %s53 = sphi 0, %s52
      %s67 = sphi 0, %s53
      %s71 = sphi 0, %s71
      %s73 = sphi 0, %s71
      %s74 = sphi 0, %s73
      %s88 = sphi 0, %s74
      %s94 = sphi 0, %s96
      %s97 = sphi 0, %s94
      %s98 = sphi 0, %s97
      %s114 = sphi 0, %s98
    $region4: #{tpu_custom_call.1} parent=1 // loop_header_branch
      %19 = sbr.rel (%p17) target = $region8
    $region5: #{tpu_custom_call.1} parent=1 // loop_body
      %s21 = ssub.s32 %s16, 1
      %s22 = ssub.s32 %s16, 2
      %s23 = sadd.s32 %s16, 1
      %s24 = ssub.s32 %s16, %s23
      %p25 = scmp.eq.s32.totalorder %s24, 0
      %s27 = sadd.s32 %s26, 1
      %s28 = scalar_select %p25, %s26, %s27
      %p31 = pneg %p25
      %p32 = scmp.eq.s32.totalorder %s16, 1
      %p33 = por %p31, %p32
      %p34 = scmp.ne.s32.totalorder %s26, %s29
      %p35 = scmp.eq.s32.totalorder %s16, 0
      %p36 = por %p34, %p35
      %p37 = scmp.ne.s32.totalorder %s26, %s29
      %p38 = scmp.eq.s32.totalorder %s21, 1
      %p39 = por %p37, %p38
      %p40 = scmp.ne.s32.totalorder %s29, %s30
      %p41 = scmp.eq.s32.totalorder %s21, 0
      %p42 = por %p40, %p41
      %p43 = scmp.ne.s32.totalorder %s29, %s30
      %p44 = scmp.eq.s32.totalorder %s22, 1
      %p45 = por %p43, %p44
      %p47 = scmp.ne.s32.totalorder %s30, %s46
      %p48 = scmp.eq.s32.totalorder %s22, 0
      %p49 = por %p47, %p48
      %s51 = sadd.s32 %s50, 1
      %p54 = scmp.eq.s32.totalorder %s16, 1
      %p55 = scmp.ne.s32.totalorder %s50, %s52
      %p56 = scmp.eq.s32.totalorder %s16, 0
      %p57 = por %p55, %p56
      %p58 = scmp.ne.s32.totalorder %s50, %s52
      %p59 = scmp.eq.s32.totalorder %s21, 1
      %p60 = por %p58, %p59
      %p61 = scmp.ne.s32.totalorder %s52, %s53
      %p62 = scmp.eq.s32.totalorder %s21, 0
      %p63 = por %p61, %p62
      %p64 = scmp.ne.s32.totalorder %s52, %s53
      %p65 = scmp.eq.s32.totalorder %s22, 1
      %p66 = por %p64, %p65
      %p68 = scmp.ne.s32.totalorder %s53, %s67
      %p69 = scmp.eq.s32.totalorder %s22, 0
      %p70 = por %p68, %p69
      %s72 = sadd.s32 %s71, 1
      %p75 = scmp.eq.s32.totalorder %s16, 1
      %p76 = scmp.ne.s32.totalorder %s71, %s73
      %p77 = scmp.eq.s32.totalorder %s16, 0
      %p78 = por %p76, %p77
      %p79 = scmp.ne.s32.totalorder %s71, %s73
      %p80 = scmp.eq.s32.totalorder %s21, 1
      %p81 = por %p79, %p80
      %p82 = scmp.ne.s32.totalorder %s73, %s74
      %p83 = scmp.eq.s32.totalorder %s21, 0
      %p84 = por %p82, %p83
      %p85 = scmp.ne.s32.totalorder %s73, %s74
      %p86 = scmp.eq.s32.totalorder %s22, 1
      %p87 = por %p85, %p86
      %p89 = scmp.ne.s32.totalorder %s74, %s88
      %p90 = scmp.eq.s32.totalorder %s22, 0
      %p91 = por %p89, %p90
      %s92 = ssub.s32 %s16, %s23
      %p93 = scmp.eq.s32.totalorder %s92, 0
      %s95 = sadd.s32 %s94, 1
      %s96 = scalar_select %p93, %s94, %s95
      %p99 = pneg %p93
      %p100 = scmp.eq.s32.totalorder %s16, 1
      %p101 = por %p99, %p100
      %p102 = scmp.ne.s32.totalorder %s94, %s97
      %p103 = scmp.eq.s32.totalorder %s16, 0
      %p104 = por %p102, %p103
      %p105 = scmp.ne.s32.totalorder %s94, %s97
      %p106 = scmp.eq.s32.totalorder %s21, 1
      %p107 = por %p105, %p106
      %p108 = scmp.ne.s32.totalorder %s97, %s98
      %p109 = scmp.eq.s32.totalorder %s21, 0
      %p110 = por %p108, %p109
      %p111 = scmp.ne.s32.totalorder %s97, %s98
      %p112 = scmp.eq.s32.totalorder %s22, 1
      %p113 = por %p111, %p112
      %p115 = scmp.ne.s32.totalorder %s98, %s114
      %p116 = scmp.eq.s32.totalorder %s22, 0
      %p117 = por %p115, %p116
      %p118 = scmp.le.s32.totalorder 1, %s16
      %p119 = scmp.lt.s32.totalorder %s16, 3
      %p120 = pnand %p118, %p119
      %p121 = pneg %p120
      // Predicated region
      $region9: #{tpu_custom_call.1} parent=5 // pred_check
        _
      $region10: #{tpu_custom_call.1} parent=5 // pred_check_branch
        %123 = sbr.rel (%p120) target = $region12
      $region11: #{tpu_custom_call.1} parent=5 // pred_region
        %s124 = ssub.s32 %s16, 1
        // Predicated region
        $region13: #{tpu_custom_call.1} parent=11 // pred_check
          %p125 = pneg %p63
        $region14: #{tpu_custom_call.1} parent=11 // pred_check_branch
          %127 = sbr.rel (%p125) target = $region16
        $region15: #{tpu_custom_call.1} parent=11 // pred_region
          %s129 = ssub.s32 256, 256
          %130 = vsyncadd [#allocation6], %s129
          %s131 = sshll.u32 [#allocation5], 4
          %s132 = int_to_ptr.vmem [resolvable:$true] %s131
          %137 = dma.hbm_to_vmem [thread:$0]  %s1, 256, %s132, [#allocation6], 64, 64, 4
        $region16: #{tpu_custom_call.1} parent=11 // pred_fallthru
          _
        // Predicated region
        $region17: #{tpu_custom_call.1} parent=11 // pred_check
          %p138 = pneg %p84
        $region18: #{tpu_custom_call.1} parent=11 // pred_check_branch
          %140 = sbr.rel (%p138) target = $region20
        $region19: #{tpu_custom_call.1} parent=11 // pred_region
          %s142 = ssub.s32 384, 384
          %143 = vsyncadd [#allocation6], %s142
          %s144 = sshll.u32 [#allocation7], 4
          %s145 = int_to_ptr.vmem [resolvable:$true] %s144
          %150 = dma.hbm_to_vmem [thread:$0]  %s2, 384, %s145, [#allocation6], 64, 64, 4
        $region20: #{tpu_custom_call.1} parent=11 // pred_fallthru
          _
      $region12: #{tpu_custom_call.1} parent=5 // pred_fallthru
        _
      %p151 = scmp.lt.s32.totalorder %s16, 2
      // Predicated region
      $region21: #{tpu_custom_call.1} parent=5 // pred_check
        %p152 = pneg %p151
      $region22: #{tpu_custom_call.1} parent=5 // pred_check_branch
        %154 = sbr.rel (%p152) target = $region24
      $region23: #{tpu_custom_call.1} parent=5 // pred_region
        // Predicated region
        $region25: #{tpu_custom_call.1} parent=23 // pred_check
          %p155 = pneg %p36
        $region26: #{tpu_custom_call.1} parent=23 // pred_check_branch
          %157 = sbr.rel (%p155) target = $region28
        $region27: #{tpu_custom_call.1} parent=23 // pred_region
          %s158 = sand.u32 %s26, 1
          %s159 = scalar_lea.sflag [#allocation3], %s158
          %s160 = sand.u32 %s26, 1
          %s161 = smul.addr %s160, 4
          %s162 = scalar_lea.vmem [#allocation2], %s161
          %s164 = ssub.s32 64, 64
          %165 = vsyncadd %s159, %s164
          %s166 = smul.addr %s16, 64
          %s167 = scalar_lea.hbm %s0, %s166
          %s169 = sshll.u32 %s162, 4
          %s170 = int_to_ptr.vmem [resolvable:$true] %s169
          %172 = dma.hbm_to_vmem [thread:$0]  %s167, 64, %s170, %s159
        $region28: #{tpu_custom_call.1} parent=23 // pred_fallthru
          _
      $region24: #{tpu_custom_call.1} parent=5 // pred_fallthru
        _
      %p173 = scmp.le.s32.totalorder 1, %s16
      %p174 = scmp.lt.s32.totalorder %s16, 3
      %p175 = pnand %p173, %p174
      %p176 = pneg %p175
      // Predicated region
      $region29: #{tpu_custom_call.1} parent=5 // pred_check
        _
      $region30: #{tpu_custom_call.1} parent=5 // pred_check_branch
        %178 = sbr.rel (%p175) target = $region32
      $region31: #{tpu_custom_call.1} parent=5 // pred_region
        %s179 = ssub.s32 %s16, 1
        %s180 = sand.u32 %s29, 1
        %s181 = scalar_lea.sflag [#allocation3], %s180
        %s182 = sand.u32 %s29, 1
        %s183 = smul.addr %s182, 4
        %s184 = scalar_lea.vmem [#allocation2], %s183
        // Predicated region
        $region33: #{tpu_custom_call.1} parent=31 // pred_check
          %p185 = pneg %p42
        $region34: #{tpu_custom_call.1} parent=31 // pred_check_branch
          %187 = sbr.rel (%p185) target = $region36
        $region35: #{tpu_custom_call.1} parent=31 // pred_region
          %188 = dma.done %s181, 64
        $region36: #{tpu_custom_call.1} parent=31 // pred_fallthru
          _
        // Predicated region
        $region37: #{tpu_custom_call.1} parent=31 // pred_check
          %p189 = pneg %p63
        $region38: #{tpu_custom_call.1} parent=31 // pred_check_branch
          %191 = sbr.rel (%p189) target = $region40
        $region39: #{tpu_custom_call.1} parent=31 // pred_region
          %192 = dma.done [#allocation6], 256
        $region40: #{tpu_custom_call.1} parent=31 // pred_fallthru
          _
        // Predicated region
        $region41: #{tpu_custom_call.1} parent=31 // pred_check
          %p193 = pneg %p84
        $region42: #{tpu_custom_call.1} parent=31 // pred_check_branch
          %195 = sbr.rel (%p193) target = $region44
        $region43: #{tpu_custom_call.1} parent=31 // pred_region
          %196 = dma.done [#allocation6], 384
        $region44: #{tpu_custom_call.1} parent=31 // pred_fallthru
          _
        %s197 = sand.u32 %s29, 1
        %s198 = scalar_lea.sflag [#allocation3], %s197
        %s199 = sand.u32 %s29, 1
        %s200 = smul.addr %s199, 4
        %s201 = scalar_lea.vmem [#allocation2], %s200
        %p202 = pneg %p42
        %p203 = pneg %p39
        %p204 = pneg %p63
        %p205 = pneg %p60
        %p206 = pneg %p84
        %p207 = pneg %p81
        %p208 = pneg %p110
        %p209 = pneg %p107
        %s210 = sand.u32 %s97, 1
        %s211 = scalar_lea.sflag [#allocation4], %s210
        %s212 = sand.u32 %s97, 1
        %s213 = smul.addr %s212, 8
        %s214 = scalar_lea.vmem [#allocation8], %s213
        %v216 = vld [vmem:[%s184] sm:$0xf]
        %v217 = vld [vmem:[#allocation5] sm:$0xf]
        %v218 = vld [vmem:[#allocation5 + $0x4] sm:$0xf]
        %v219 = vld [vmem:[#allocation5 + $0x8] sm:$0xf]
        %v220 = vld [vmem:[#allocation5 + $0xc] sm:$0xf]
        %v225 = vunpack.c.l.b16 %v217
        %v226 = vunpack.c.l.b16 %v218
        %v227 = vunpack.c.l.b16 %v219
        %v228 = vunpack.c.l.b16 %v220
        %v229 = vpack.c.b16 %v226, %v225
        %v230 = vpack.c.b16 %v228, %v227
        %vm233 = vcmask 261120
        %v235 = vsel %vm233, %v216, 0
        %237 = vmatprep.subr.bf16.mxu0 0
        %238 = vmatpush1.bf16.msra.mxu0 0
        %239 = vmatprep.subr.bf16.mxu0 0
        %240 = vmatpush1.bf16.msra.mxu0 0
        %241 = vmatprep.subr.bf16.mxu0 0
        %242 = vmatpush1.bf16.msra.mxu0 0
        %243 = vmatprep.subr.bf16.mxu0 0
        %244 = vmatpush1.bf16.msra.mxu0 0
        %245 = vmatprep.subr.bf16.mxu0 0
        %246 = vmatpush1.bf16.msra.mxu0 0
        %247 = vmatprep.subr.bf16.mxu0 0
        %248 = vmatpush1.bf16.msra.mxu0 0
        %249 = vmatprep.subr.bf16.mxu0 0
        %250 = vmatpush1.bf16.msra.mxu0 %v230
        %251 = vmatprep.subr.bf16.mxu0 0
        %252 = vmatpush1.bf16.msra.mxu0 %v229
        %253 = vmatprep.subr.bf16.mxu0 0
        %254 = vmatpush2.bf16.msra.mxu0 0
        %255 = vmatprep.subr.bf16.mxu0 0
        %256 = vmatpush2.bf16.msra.mxu0 0
        %257 = vmatprep.subr.bf16.mxu0 0
        %258 = vmatpush2.bf16.msra.mxu0 0
        %259 = vmatprep.subr.bf16.mxu0 0
        %260 = vmatpush2.bf16.msra.mxu0 0
        %261 = vmatprep.subr.bf16.mxu0 0
        %262 = vmatpush2.bf16.msra.mxu0 0
        %263 = vmatprep.subr.bf16.mxu0 0
        %264 = vmatpush2.bf16.msra.mxu0 0
        %265 = vmatprep.subr.bf16.mxu0 0
        %266 = vmatpush2.bf16.msra.mxu0 0
        %267 = vmatprep.subr.bf16.mxu0 0
        %268 = vmatpush2.bf16.msra.mxu0 0
        %269 = vmatprep.mubr.bf16.mxu0 0
        %270 = vmatmul.mubr.bf16.gmra.mxu0 %v235
        %v271 = vpop.f32.mrf.mxu0
        %v272 = vadd.f32 0.0, %v271
        %v273 = vpop.f32.mrf.mxu0
        %v274 = vpop.f32.mrf.mxu0
        %v275 = vpop.f32.mrf.mxu0
        %276 = vdwg.mxu0
        %v277 = vmul.f32 %v272, 0.5
        %v278 = vmul.f32 %v272, 0.044715
        %v279 = vmul.f32 %v278, %v272
        %v280 = vmul.f32 %v279, %v272
        %v281 = vadd.f32 %v272, %v280
        %v282 = vmul.f32 %v281, 0.7978846
        %v283 = vtanh.pop %v282
        %v284 = vadd.f32 %v283, 1.0
        %v285 = vmul.f32 %v277, %v284
        %v286 = vpack.c.bf16 %v285, %v285
        %v287 = vld [vmem:[#allocation7] sm:$0xf]
        %v288 = vld [vmem:[#allocation7 + $0x4] sm:$0xf]
        %v289 = vld [vmem:[#allocation7 + $0x8] sm:$0xf]
        %v290 = vld [vmem:[#allocation7 + $0xc] sm:$0xf]
        %v291 = vld [vmem:[#allocation7 + $0x10] sm:$0xf]
        %v292 = vld [vmem:[#allocation7 + $0x14] sm:$0xf]
        %v299 = vunpack.c.l.b16 %v287
        %v300 = vunpack.c.l.b16 %v288
        %v301 = vunpack.c.l.b16 %v289
        %v302 = vunpack.c.l.b16 %v290
        %v303 = vunpack.c.l.b16 %v291
        %v304 = vunpack.c.l.b16 %v292
        %v305 = vpack.c.b16 %v300, %v299
        %v306 = vpack.c.b16 %v302, %v301
        %v307 = vpack.c.b16 %v304, %v303
        %vm311 = vcmask 392192
        %v313 = vsel %vm311, %v286, 0
        %315 = vmatprep.subr.bf16.mxu0 0
        %316 = vmatpush1.bf16.msra.mxu0 0
        %317 = vmatprep.subr.bf16.mxu0 0
        %318 = vmatpush1.bf16.msra.mxu0 0
        %319 = vmatprep.subr.bf16.mxu0 0
        %320 = vmatpush1.bf16.msra.mxu0 0
        %321 = vmatprep.subr.bf16.mxu0 0
        %322 = vmatpush1.bf16.msra.mxu0 0
        %323 = vmatprep.subr.bf16.mxu0 0
        %324 = vmatpush1.bf16.msra.mxu0 0
        %325 = vmatprep.subr.bf16.mxu0 0
        %326 = vmatpush1.bf16.msra.mxu0 %v307
        %327 = vmatprep.subr.bf16.mxu0 0
        %328 = vmatpush1.bf16.msra.mxu0 %v306
        %329 = vmatprep.subr.bf16.mxu0 0
        %330 = vmatpush1.bf16.msra.mxu0 %v305
        %331 = vmatprep.subr.bf16.mxu0 0
        %332 = vmatpush2.bf16.msra.mxu0 0
        %333 = vmatprep.subr.bf16.mxu0 0
        %334 = vmatpush2.bf16.msra.mxu0 0
        %335 = vmatprep.subr.bf16.mxu0 0
        %336 = vmatpush2.bf16.msra.mxu0 0
        %337 = vmatprep.subr.bf16.mxu0 0
        %338 = vmatpush2.bf16.msra.mxu0 0
        %339 = vmatprep.subr.bf16.mxu0 0
        %340 = vmatpush2.bf16.msra.mxu0 0
        %341 = vmatprep.subr.bf16.mxu0 0
        %342 = vmatpush2.bf16.msra.mxu0 0
        %343 = vmatprep.subr.bf16.mxu0 0
        %344 = vmatpush2.bf16.msra.mxu0 0
        %345 = vmatprep.subr.bf16.mxu0 0
        %346 = vmatpush2.bf16.msra.mxu0 0
        %347 = vmatprep.mubr.bf16.mxu0 0
        %348 = vmatmul.mubr.bf16.gmra.mxu0 %v313
        %v349 = vpop.f32.mrf.mxu0
        %v350 = vadd.f32 0.0, %v349
        %v351 = vpop.f32.mrf.mxu0
        %v352 = vpop.f32.mrf.mxu0
        %v353 = vpop.f32.mrf.mxu0
        %354 = vdwg.mxu0
        %355 = vst [vmem:[%s214] sm:$0xff] %v350
        %s356 = sand.u32 %s97, 1
        %s357 = scalar_lea.sflag [#allocation4], %s356
        %s358 = sand.u32 %s97, 1
        %s359 = smul.addr %s358, 8
        %s360 = scalar_lea.vmem [#allocation8], %s359
        // Predicated region
        $region45: #{tpu_custom_call.1} parent=31 // pred_check
          %p361 = pneg %p107
        $region46: #{tpu_custom_call.1} parent=31 // pred_check_branch
          %363 = sbr.rel (%p361) target = $region48
        $region47: #{tpu_custom_call.1} parent=31 // pred_region
          %s365 = ssub.s32 128, 128
          %366 = vsyncadd %s357, %s365
          %s367 = smul.addr %s21, 128
          %s368 = scalar_lea.hbm %s3, %s367
          %s370 = sshll.u32 %s360, 4
          %s371 = int_to_ptr.vmem [resolvable:$true] %s370
          %373 = dma.vmem_to_hbm [thread:$0]  %s371, 128, %s368, %s357
        $region48: #{tpu_custom_call.1} parent=31 // pred_fallthru
          _
      $region32: #{tpu_custom_call.1} parent=5 // pred_fallthru
        _
      %p374 = scmp.le.s32.totalorder 2, %s16
      // Predicated region
      $region49: #{tpu_custom_call.1} parent=5 // pred_check
        %p375 = pneg %p374
      $region50: #{tpu_custom_call.1} parent=5 // pred_check_branch
        %377 = sbr.rel (%p375) target = $region52
      $region51: #{tpu_custom_call.1} parent=5 // pred_region
        %s378 = ssub.s32 %s16, 2
        // Predicated region
        $region53: #{tpu_custom_call.1} parent=51 // pred_check
          %p379 = pneg %p113
        $region54: #{tpu_custom_call.1} parent=51 // pred_check_branch
          %381 = sbr.rel (%p379) target = $region56
        $region55: #{tpu_custom_call.1} parent=51 // pred_region
          %s382 = sand.u32 %s98, 1
          %s383 = scalar_lea.sflag [#allocation4], %s382
          %s384 = sand.u32 %s98, 1
          %s385 = smul.addr %s384, 8
          %s386 = scalar_lea.vmem [#allocation8], %s385
          %387 = dma.done %s383, 128
        $region56: #{tpu_custom_call.1} parent=51 // pred_fallthru
          _
      $region52: #{tpu_custom_call.1} parent=5 // pred_fallthru
        _
    $region6: #{tpu_custom_call.1} parent=1 // loop_footer
      %s20 = sadd.s32 1, %s16
    $region7: #{tpu_custom_call.1} parent=1 // loop_footer_branch
      %15 = sbr.rel target = $region3
    $region8: #{tpu_custom_call.1} parent=1 // loop_exit
      _
    %388 = vsyncpa [#allocation3], 1
    %s389 = scalar_lea.sflag [#allocation3], 1
    %390 = vsyncpa %s389, 1
    %391 = vsyncpa [#allocation6], 1
    %392 = vsyncpa [#allocation4], 1
    %s393 = scalar_lea.sflag [#allocation4], 1
    %394 = vsyncpa %s393, 1

// kernel: tpu_custom_call.1
$region0: #{tpu_custom_call.1}
  #allocation0 [shape = 'u32[]', space=smem, size = 0x4, offset = 0x4, fixed_abs, tag = 'smem constant byte address 0x4 - core index']
  #allocation1 [shape = 'u32[144,128]{1,0:T(1,128)}', space=vmem, size = 0x12000, scoped, tag = 'internal scratch']
  %s0 = inlined_call_operand.hbm [shape: bf16[16,32], index: 0, kind: input, shape index: {}]
  %s1 = inlined_call_operand.hbm [shape: bf16[32,48], index: 1, kind: input, shape index: {}]
  %s2 = inlined_call_operand.hbm [shape: bf16[48,128], index: 2, kind: input, shape index: {}]
  %s3 = inlined_call_operand.hbm [shape: f32[16,128], index: 3, kind: output, shape index: {}]
  %s4 = sld [smem:[#allocation0]]
  $region57: #{tpu_custom_call.1} parent=0
    _
  %s6 = ssub.s32 1, %s4
  %s7 = scalar_select 0, %s6, %s4
  $region1: #{tpu_custom_call.1} parent=0
    #allocation2 [shape = 'u8[4096]{0}', space=vmem, size = 0x1000, scoped, tag = 'input window, operand 0']
    #allocation3 [shape = 's32[2]{0}', space=sflag, size = 0x8, scoped, tag = 'scoped memory for tpu_custom_call.1']
    #allocation4 [shape = 's32[2]{0}', space=sflag, size = 0x8, scoped, tag = 'scoped memory for tpu_custom_call.1']
    #allocation5 [shape = 'u8[8192]{0}', space=vmem, size = 0x2000, scoped, tag = 'input window, operand 1, single buffered']
    #allocation6 [shape = 's32[1]{0}', space=sflag, size = 0x4, scoped, tag = 'scoped memory for tpu_custom_call.1']
    #allocation7 [shape = 'u8[12288]{0}', space=vmem, size = 0x3000, scoped, tag = 'input window, operand 2, single buffered']
    #allocation8 [shape = 'u8[8192]{0}', space=vmem, size = 0x2000, scoped, tag = 'output window, operand 0']
    %8 = vsyncpa [#allocation3], 0
    %s9 = scalar_lea.sflag [#allocation3], 1
    %10 = vsyncpa %s9, 0
    %11 = vsyncpa [#allocation6], 0
    %12 = vsyncpa [#allocation4], 0
    %s13 = scalar_lea.sflag [#allocation4], 1
    %14 = vsyncpa %s13, 0
    loop: start=0, step=1, limit=4
    $region2: #{tpu_custom_call.1} parent=1 // loop_pre_header
      _
    $region3: #{tpu_custom_call.1} parent=1 // loop_header
      %s16 = sphi 0, %s20
      %p17 = scmp.ge.s32.totalorder %s16, 4
      %s26 = sphi 0, %s28
      %s29 = sphi 0, %s26
      %s30 = sphi 0, %s29
      %s46 = sphi 0, %s30
      %s50 = sphi 0, %s50
      %s52 = sphi 0, %s50
      %s53 = sphi 0, %s52
      %s67 = sphi 0, %s53
      %s71 = sphi 0, %s71
      %s73 = sphi 0, %s71
      %s74 = sphi 0, %s73
      %s88 = sphi 0, %s74
      %s94 = sphi 0, %s96
      %s97 = sphi 0, %s94
      %s98 = sphi 0, %s97
      %s114 = sphi 0, %s98
    $region4: #{tpu_custom_call.1} parent=1 // loop_header_branch
      %19 = sbr.rel (%p17) target = $region8
    $region5: #{tpu_custom_call.1} parent=1 // loop_body
      %s21 = ssub.s32 %s16, 1
      %s22 = ssub.s32 %s16, 2
      %s23 = sadd.s32 %s16, 1
      %s24 = ssub.s32 %s16, %s23
      %p25 = scmp.eq.s32.totalorder %s24, 0
      %s27 = sadd.s32 %s26, 1
      %s28 = scalar_select %p25, %s26, %s27
      %p31 = pneg %p25
      %p32 = scmp.eq.s32.totalorder %s16, 1
      %p33 = por %p31, %p32
      %p34 = scmp.ne.s32.totalorder %s26, %s29
      %p35 = scmp.eq.s32.totalorder %s16, 0
      %p36 = por %p34, %p35
      %p37 = scmp.ne.s32.totalorder %s26, %s29
      %p38 = scmp.eq.s32.totalorder %s21, 1
      %p39 = por %p37, %p38
      %p40 = scmp.ne.s32.totalorder %s29, %s30
      %p41 = scmp.eq.s32.totalorder %s21, 0
      %p42 = por %p40, %p41
      %p43 = scmp.ne.s32.totalorder %s29, %s30
      %p44 = scmp.eq.s32.totalorder %s22, 1
      %p45 = por %p43, %p44
      %p47 = scmp.ne.s32.totalorder %s30, %s46
      %p48 = scmp.eq.s32.totalorder %s22, 0
      %p49 = por %p47, %p48
      %s51 = sadd.s32 %s50, 1
      %p54 = scmp.eq.s32.totalorder %s16, 1
      %p55 = scmp.ne.s32.totalorder %s50, %s52
      %p56 = scmp.eq.s32.totalorder %s16, 0
      %p57 = por %p55, %p56
      %p58 = scmp.ne.s32.totalorder %s50, %s52
      %p59 = scmp.eq.s32.totalorder %s21, 1
      %p60 = por %p58, %p59
      %p61 = scmp.ne.s32.totalorder %s52, %s53
      %p62 = scmp.eq.s32.totalorder %s21, 0
      %p63 = por %p61, %p62
      %p64 = scmp.ne.s32.totalorder %s52, %s53
      %p65 = scmp.eq.s32.totalorder %s22, 1
      %p66 = por %p64, %p65
      %p68 = scmp.ne.s32.totalorder %s53, %s67
      %p69 = scmp.eq.s32.totalorder %s22, 0
      %p70 = por %p68, %p69
      %s72 = sadd.s32 %s71, 1
      %p75 = scmp.eq.s32.totalorder %s16, 1
      %p76 = scmp.ne.s32.totalorder %s71, %s73
      %p77 = scmp.eq.s32.totalorder %s16, 0
      %p78 = por %p76, %p77
      %p79 = scmp.ne.s32.totalorder %s71, %s73
      %p80 = scmp.eq.s32.totalorder %s21, 1
      %p81 = por %p79, %p80
      %p82 = scmp.ne.s32.totalorder %s73, %s74
      %p83 = scmp.eq.s32.totalorder %s21, 0
      %p84 = por %p82, %p83
      %p85 = scmp.ne.s32.totalorder %s73, %s74
      %p86 = scmp.eq.s32.totalorder %s22, 1
      %p87 = por %p85, %p86
      %p89 = scmp.ne.s32.totalorder %s74, %s88
      %p90 = scmp.eq.s32.totalorder %s22, 0
      %p91 = por %p89, %p90
      %s92 = ssub.s32 %s16, %s23
      %p93 = scmp.eq.s32.totalorder %s92, 0
      %s95 = sadd.s32 %s94, 1
      %s96 = scalar_select %p93, %s94, %s95
      %p99 = pneg %p93
      %p100 = scmp.eq.s32.totalorder %s16, 1
      %p101 = por %p99, %p100
      %p102 = scmp.ne.s32.totalorder %s94, %s97
      %p103 = scmp.eq.s32.totalorder %s16, 0
      %p104 = por %p102, %p103
      %p105 = scmp.ne.s32.totalorder %s94, %s97
      %p106 = scmp.eq.s32.totalorder %s21, 1
      %p107 = por %p105, %p106
      %p108 = scmp.ne.s32.totalorder %s97, %s98
      %p109 = scmp.eq.s32.totalorder %s21, 0
      %p110 = por %p108, %p109
      %p111 = scmp.ne.s32.totalorder %s97, %s98
      %p112 = scmp.eq.s32.totalorder %s22, 1
      %p113 = por %p111, %p112
      %p115 = scmp.ne.s32.totalorder %s98, %s114
      %p116 = scmp.eq.s32.totalorder %s22, 0
      %p117 = por %p115, %p116
      %p118 = scmp.le.s32.totalorder 1, %s16
      %p119 = scmp.lt.s32.totalorder %s16, 3
      %p120 = pnand %p118, %p119
      %p121 = pneg %p120
      // Predicated region
      $region9: #{tpu_custom_call.1} parent=5 // pred_check
        _
      $region10: #{tpu_custom_call.1} parent=5 // pred_check_branch
        %123 = sbr.rel (%p120) target = $region12
      $region11: #{tpu_custom_call.1} parent=5 // pred_region
        %s124 = ssub.s32 %s16, 1
        // Predicated region
        $region13: #{tpu_custom_call.1} parent=11 // pred_check
          %p125 = pneg %p63
        $region14: #{tpu_custom_call.1} parent=11 // pred_check_branch
          %127 = sbr.rel (%p125) target = $region16
        $region15: #{tpu_custom_call.1} parent=11 // pred_region
          %s129 = ssub.s32 256, 256
          %130 = vsyncadd [#allocation6], %s129
          %s131 = sshll.u32 [#allocation5], 4
          %s132 = int_to_ptr.vmem [resolvable:$true] %s131
          %137 = dma.hbm_to_vmem [thread:$0]  %s1, 256, %s132, [#allocation6], 64, 64, 4
        $region16: #{tpu_custom_call.1} parent=11 // pred_fallthru
          _
        // Predicated region
        $region17: #{tpu_custom_call.1} parent=11 // pred_check
          %p138 = pneg %p84
        $region18: #{tpu_custom_call.1} parent=11 // pred_check_branch
          %140 = sbr.rel (%p138) target = $region20
        $region19: #{tpu_custom_call.1} parent=11 // pred_region
          %s142 = ssub.s32 384, 384
          %143 = vsyncadd [#allocation6], %s142
          %s144 = sshll.u32 [#allocation7], 4
          %s145 = int_to_ptr.vmem [resolvable:$true] %s144
          %150 = dma.hbm_to_vmem [thread:$0]  %s2, 384, %s145, [#allocation6], 64, 64, 4
        $region20: #{tpu_custom_call.1} parent=11 // pred_fallthru
          _
      $region12: #{tpu_custom_call.1} parent=5 // pred_fallthru
        _
      %p151 = scmp.lt.s32.totalorder %s16, 2
      // Predicated region
      $region21: #{tpu_custom_call.1} parent=5 // pred_check
        %p152 = pneg %p151
      $region22: #{tpu_custom_call.1} parent=5 // pred_check_branch
        %154 = sbr.rel (%p152) target = $region24
      $region23: #{tpu_custom_call.1} parent=5 // pred_region
        // Predicated region
        $region25: #{tpu_custom_call.1} parent=23 // pred_check
          %p155 = pneg %p36
        $region26: #{tpu_custom_call.1} parent=23 // pred_check_branch
          %157 = sbr.rel (%p155) target = $region28
        $region27: #{tpu_custom_call.1} parent=23 // pred_region
          %s158 = sand.u32 %s26, 1
          %s159 = scalar_lea.sflag [#allocation3], %s158
          %s160 = sand.u32 %s26, 1
          %s161 = smul.addr %s160, 4
          %s162 = scalar_lea.vmem [#allocation2], %s161
          %s164 = ssub.s32 64, 64
          %165 = vsyncadd %s159, %s164
          %s166 = smul.addr %s16, 64
          %s167 = scalar_lea.hbm %s0, %s166
          %s169 = sshll.u32 %s162, 4
          %s170 = int_to_ptr.vmem [resolvable:$true] %s169
          %172 = dma.hbm_to_vmem [thread:$0]  %s167, 64, %s170, %s159
        $region28: #{tpu_custom_call.1} parent=23 // pred_fallthru
          _
      $region24: #{tpu_custom_call.1} parent=5 // pred_fallthru
        _
      %p173 = scmp.le.s32.totalorder 1, %s16
      %p174 = scmp.lt.s32.totalorder %s16, 3
      %p175 = pnand %p173, %p174
      %p176 = pneg %p175
      // Predicated region
      $region29: #{tpu_custom_call.1} parent=5 // pred_check
        _
      $region30: #{tpu_custom_call.1} parent=5 // pred_check_branch
        %178 = sbr.rel (%p175) target = $region32
      $region31: #{tpu_custom_call.1} parent=5 // pred_region
        %s179 = ssub.s32 %s16, 1
        %s180 = sand.u32 %s29, 1
        %s181 = scalar_lea.sflag [#allocation3], %s180
        %s182 = sand.u32 %s29, 1
        %s183 = smul.addr %s182, 4
        %s184 = scalar_lea.vmem [#allocation2], %s183
        // Predicated region
        $region33: #{tpu_custom_call.1} parent=31 // pred_check
          %p185 = pneg %p42
        $region34: #{tpu_custom_call.1} parent=31 // pred_check_branch
          %187 = sbr.rel (%p185) target = $region36
        $region35: #{tpu_custom_call.1} parent=31 // pred_region
          %188 = dma.done %s181, 64
        $region36: #{tpu_custom_call.1} parent=31 // pred_fallthru
          _
        // Predicated region
        $region37: #{tpu_custom_call.1} parent=31 // pred_check
          %p189 = pneg %p63
        $region38: #{tpu_custom_call.1} parent=31 // pred_check_branch
          %191 = sbr.rel (%p189) target = $region40
        $region39: #{tpu_custom_call.1} parent=31 // pred_region
          %192 = dma.done [#allocation6], 256
        $region40: #{tpu_custom_call.1} parent=31 // pred_fallthru
          _
        // Predicated region
        $region41: #{tpu_custom_call.1} parent=31 // pred_check
          %p193 = pneg %p84
        $region42: #{tpu_custom_call.1} parent=31 // pred_check_branch
          %195 = sbr.rel (%p193) target = $region44
        $region43: #{tpu_custom_call.1} parent=31 // pred_region
          %196 = dma.done [#allocation6], 384
        $region44: #{tpu_custom_call.1} parent=31 // pred_fallthru
          _
        %s197 = sand.u32 %s29, 1
        %s198 = scalar_lea.sflag [#allocation3], %s197
        %s199 = sand.u32 %s29, 1
        %s200 = smul.addr %s199, 4
        %s201 = scalar_lea.vmem [#allocation2], %s200
        %p202 = pneg %p42
        %p203 = pneg %p39
        %p204 = pneg %p63
        %p205 = pneg %p60
        %p206 = pneg %p84
        %p207 = pneg %p81
        %p208 = pneg %p110
        %p209 = pneg %p107
        %s210 = sand.u32 %s97, 1
        %s211 = scalar_lea.sflag [#allocation4], %s210
        %s212 = sand.u32 %s97, 1
        %s213 = smul.addr %s212, 8
        %s214 = scalar_lea.vmem [#allocation8], %s213
        %v216 = vld [vmem:[%s184] sm:$0xf]
        %v217 = vld [vmem:[#allocation5] sm:$0xf]
        %v218 = vld [vmem:[#allocation5 + $0x4] sm:$0xf]
        %v219 = vld [vmem:[#allocation5 + $0x8] sm:$0xf]
        %v220 = vld [vmem:[#allocation5 + $0xc] sm:$0xf]
        %v225 = vunpack.c.l.b16 %v217
        %v226 = vunpack.c.l.b16 %v218
        %v227 = vunpack.c.l.b16 %v219
        %v228 = vunpack.c.l.b16 %v220
        %v229 = vpack.c.b16 %v226, %v225
        %v230 = vpack.c.b16 %v228, %v227
        %vm233 = vcmask 261120
        %v235 = vsel %vm233, %v216, 0
        %237 = vmatprep.subr.bf16.mxu0 0
        %238 = vmatpush1.bf16.msra.mxu0 0
        %239 = vmatprep.subr.bf16.mxu0 0
        %240 = vmatpush1.bf16.msra.mxu0 0
        %241 = vmatprep.subr.bf16.mxu0 0
        %242 = vmatpush1.bf16.msra.mxu0 0
        %243 = vmatprep.subr.bf16.mxu0 0
        %244 = vmatpush1.bf16.msra.mxu0 0
        %245 = vmatprep.subr.bf16.mxu0 0
        %246 = vmatpush1.bf16.msra.mxu0 0
        %247 = vmatprep.subr.bf16.mxu0 0
        %248 = vmatpush1.bf16.msra.mxu0 0
        %249 = vmatprep.subr.bf16.mxu0 0
        %250 = vmatpush1.bf16.msra.mxu0 %v230
        %251 = vmatprep.subr.bf16.mxu0 0
        %252 = vmatpush1.bf16.msra.mxu0 %v229
        %253 = vmatprep.subr.bf16.mxu0 0
        %254 = vmatpush2.bf16.msra.mxu0 0
        %255 = vmatprep.subr.bf16.mxu0 0
        %256 = vmatpush2.bf16.msra.mxu0 0
        %257 = vmatprep.subr.bf16.mxu0 0
        %258 = vmatpush2.bf16.msra.mxu0 0
        %259 = vmatprep.subr.bf16.mxu0 0
        %260 = vmatpush2.bf16.msra.mxu0 0
        %261 = vmatprep.subr.bf16.mxu0 0
        %262 = vmatpush2.bf16.msra.mxu0 0
        %263 = vmatprep.subr.bf16.mxu0 0
        %264 = vmatpush2.bf16.msra.mxu0 0
        %265 = vmatprep.subr.bf16.mxu0 0
        %266 = vmatpush2.bf16.msra.mxu0 0
        %267 = vmatprep.subr.bf16.mxu0 0
        %268 = vmatpush2.bf16.msra.mxu0 0
        %269 = vmatprep.mubr.bf16.mxu0 0
        %270 = vmatmul.mubr.bf16.gmra.mxu0 %v235
        %v271 = vpop.f32.mrf.mxu0
        %v272 = vadd.f32 0.0, %v271
        %v273 = vpop.f32.mrf.mxu0
        %v274 = vpop.f32.mrf.mxu0
        %v275 = vpop.f32.mrf.mxu0
        %276 = vdwg.mxu0
        %v277 = vmul.f32 %v272, 0.5
        %v278 = vmul.f32 %v272, 0.044715
        %v279 = vmul.f32 %v278, %v272
        %v280 = vmul.f32 %v279, %v272
        %v281 = vadd.f32 %v272, %v280
        %v282 = vmul.f32 %v281, 0.7978846
        %v283 = vtanh.pop %v282
        %v284 = vadd.f32 %v283, 1.0
        %v285 = vmul.f32 %v277, %v284
        %v286 = vpack.c.bf16 %v285, %v285
        %v287 = vld [vmem:[#allocation7] sm:$0xf]
        %v288 = vld [vmem:[#allocation7 + $0x4] sm:$0xf]
        %v289 = vld [vmem:[#allocation7 + $0x8] sm:$0xf]
        %v290 = vld [vmem:[#allocation7 + $0xc] sm:$0xf]
        %v291 = vld [vmem:[#allocation7 + $0x10] sm:$0xf]
        %v292 = vld [vmem:[#allocation7 + $0x14] sm:$0xf]
        %v299 = vunpack.c.l.b16 %v287
        %v300 = vunpack.c.l.b16 %v288
        %v301 = vunpack.c.l.b16 %v289
        %v302 = vunpack.c.l.b16 %v290
        %v303 = vunpack.c.l.b16 %v291
        %v304 = vunpack.c.l.b16 %v292
        %v305 = vpack.c.b16 %v300, %v299
        %v306 = vpack.c.b16 %v302, %v301
        %v307 = vpack.c.b16 %v304, %v303
        %vm311 = vcmask 392192
        %v313 = vsel %vm311, %v286, 0
        %315 = vmatprep.subr.bf16.mxu0 0
        %316 = vmatpush1.bf16.msra.mxu0 0
        %317 = vmatprep.subr.bf16.mxu0 0
        %318 = vmatpush1.bf16.msra.mxu0 0
        %319 = vmatprep.subr.bf16.mxu0 0
        %320 = vmatpush1.bf16.msra.mxu0 0
        %321 = vmatprep.subr.bf16.mxu0 0
        %322 = vmatpush1.bf16.msra.mxu0 0
        %323 = vmatprep.subr.bf16.mxu0 0
        %324 = vmatpush1.bf16.msra.mxu0 0
        %325 = vmatprep.subr.bf16.mxu0 0
        %326 = vmatpush1.bf16.msra.mxu0 %v307
        %327 = vmatprep.subr.bf16.mxu0 0
        %328 = vmatpush1.bf16.msra.mxu0 %v306
        %329 = vmatprep.subr.bf16.mxu0 0
        %330 = vmatpush1.bf16.msra.mxu0 %v305
        %331 = vmatprep.subr.bf16.mxu0 0
        %332 = vmatpush2.bf16.msra.mxu0 0
        %333 = vmatprep.subr.bf16.mxu0 0
        %334 = vmatpush2.bf16.msra.mxu0 0
        %335 = vmatprep.subr.bf16.mxu0 0
        %336 = vmatpush2.bf16.msra.mxu0 0
        %337 = vmatprep.subr.bf16.mxu0 0
        %338 = vmatpush2.bf16.msra.mxu0 0
        %339 = vmatprep.subr.bf16.mxu0 0
        %340 = vmatpush2.bf16.msra.mxu0 0
        %341 = vmatprep.subr.bf16.mxu0 0
        %342 = vmatpush2.bf16.msra.mxu0 0
        %343 = vmatprep.subr.bf16.mxu0 0
        %344 = vmatpush2.bf16.msra.mxu0 0
        %345 = vmatprep.subr.bf16.mxu0 0
        %346 = vmatpush2.bf16.msra.mxu0 0
        %347 = vmatprep.mubr.bf16.mxu0 0
        %348 = vmatmul.mubr.bf16.gmra.mxu0 %v313
        %v349 = vpop.f32.mrf.mxu0
        %v350 = vadd.f32 0.0, %v349
        %v351 = vpop.f32.mrf.mxu0
        %v352 = vpop.f32.mrf.mxu0
        %v353 = vpop.f32.mrf.mxu0
        %354 = vdwg.mxu0
        %355 = vst [vmem:[%s214] sm:$0xff] %v350
        %s356 = sand.u32 %s97, 1
        %s357 = scalar_lea.sflag [#allocation4], %s356
        %s358 = sand.u32 %s97, 1
        %s359 = smul.addr %s358, 8
        %s360 = scalar_lea.vmem [#allocation8], %s359
        // Predicated region
        $region45: #{tpu_custom_call.1} parent=31 // pred_check
          %p361 = pneg %p107
        $region46: #{tpu_custom_call.1} parent=31 // pred_check_branch
          %363 = sbr.rel (%p361) target = $region48
        $region47: #{tpu_custom_call.1} parent=31 // pred_region
          %s365 = ssub.s32 128, 128
          %366 = vsyncadd %s357, %s365
          %s367 = smul.addr %s21, 128
          %s368 = scalar_lea.hbm %s3, %s367
          %s370 = sshll.u32 %s360, 4
          %s371 = int_to_ptr.vmem [resolvable:$true] %s370
          %373 = dma.vmem_to_hbm [thread:$0]  %s371, 128, %s368, %s357
        $region48: #{tpu_custom_call.1} parent=31 // pred_fallthru
          _
      $region32: #{tpu_custom_call.1} parent=5 // pred_fallthru
        _
      %p374 = scmp.le.s32.totalorder 2, %s16
      // Predicated region
      $region49: #{tpu_custom_call.1} parent=5 // pred_check
        %p375 = pneg %p374
      $region50: #{tpu_custom_call.1} parent=5 // pred_check_branch
        %377 = sbr.rel (%p375) target = $region52
      $region51: #{tpu_custom_call.1} parent=5 // pred_region
        %s378 = ssub.s32 %s16, 2
        // Predicated region
        $region53: #{tpu_custom_call.1} parent=51 // pred_check
          %p379 = pneg %p113
        $region54: #{tpu_custom_call.1} parent=51 // pred_check_branch
          %381 = sbr.rel (%p379) target = $region56
        $region55: #{tpu_custom_call.1} parent=51 // pred_region
          %s382 = sand.u32 %s98, 1
          %s383 = scalar_lea.sflag [#allocation4], %s382
          %s384 = sand.u32 %s98, 1
          %s385 = smul.addr %s384, 8
          %s386 = scalar_lea.vmem [#allocation8], %s385
          %387 = dma.done %s383, 128
        $region56: #{tpu_custom_call.1} parent=51 // pred_fallthru
          _
      $region52: #{tpu_custom_call.1} parent=5 // pred_fallthru
        _
    $region6: #{tpu_custom_call.1} parent=1 // loop_footer
      %s20 = sadd.s32 1, %s16
    $region7: #{tpu_custom_call.1} parent=1 // loop_footer_branch
      %15 = sbr.rel target = $region3
    $region8: #{tpu_custom_call.1} parent=1 // loop_exit
      _
    %388 = vsyncpa [#allocation3], 1
    %s389 = scalar_lea.sflag [#allocation3], 1
    %390 = vsyncpa %s389, 1
    %391 = vsyncpa [#allocation6], 1
    %392 = vsyncpa [#allocation4], 1
    %s393 = scalar_lea.sflag [#allocation4], 1
    %394 = vsyncpa %s393, 1

</llo_original>
